<compile_context>
chip_gen: v5e
topology: v5e:2x2
jax: 0.10.0
libtpu: 0.0.40
codegen_flags: <defaults>
</compile_context>

<pallas_src>
import jax
import jax.numpy as jnp
from jax.experimental import pallas as pl
from jax.experimental.pallas import tpu as pltpu


def _round_up(n, m):
    return ((n + m - 1) // m) * m


def mlp_kernel(x_ref, w1_ref, b1_ref, w2_ref, b2_ref, o_ref):
    # x_ref : (tile_B, D) f32     w1_ref: (D, Hp) bf16    b1_ref: (1, Hp) f32
    # w2_ref: (Hp, Cp)   bf16     b2_ref: (1, Cp) f32     o_ref : (tile_B, Cp) f32
    # In-kernel bf16 cast of x (VPU) -> no separate XLA cast pass over x in HBM.
    x = x_ref[...].astype(jnp.bfloat16)
    # fc1 on the MXU (bf16 operands, f32 accumulate); bias add + ReLU in f32.
    h = jnp.dot(x, w1_ref[...], preferred_element_type=jnp.float32) + b1_ref[...]
    h = jnp.maximum(h, 0.0)
    # fc2: activation downcast to bf16 for the MXU, f32 accumulate + bias,
    # lane-dense f32 store.
    out = jnp.dot(h.astype(jnp.bfloat16), w2_ref[...],
                  preferred_element_type=jnp.float32) + b2_ref[...]
    o_ref[...] = out.astype(o_ref.dtype)


def make_mlp_forward(w1, b1, w2, b2, *, batch_tile=512, no_grid_cutoff=1024):
    """Build a jitted forward(x) for the MLPClassifier.

    w1: (D, H), b1: (H,) or (1, H), w2: (H, C), b2: (C,) or (1, C).
    Weight padding/casting is done ONCE here (hoisted out of the per-call path).
    Returns forward(x) with x of shape (B, C_in, H, W) or (B, D); logits f32 (B, C).
    """
    D, H = w1.shape
    C = w2.shape[1]
    Hp = _round_up(H, 128)
    Cp = _round_up(C, 128)

    # One-time pad + cast (device arrays closed over by the jitted forward).
    w1_p = jnp.pad(w1.astype(jnp.float32), ((0, 0), (0, Hp - H))).astype(jnp.bfloat16)
    b1_p = jnp.pad(b1.reshape(1, H).astype(jnp.float32), ((0, 0), (0, Hp - H)))
    w2_p = jnp.pad(w2.astype(jnp.float32), ((0, Hp - H), (0, Cp - C))).astype(jnp.bfloat16)
    b2_p = jnp.pad(b2.reshape(1, C).astype(jnp.float32), ((0, 0), (0, Cp - C)))

    @jax.jit
    def forward(x):
        B = x.shape[0]
        x2d = x.reshape(B, -1)
        assert x2d.shape[1] == D, f"flattened input size {x2d.shape[1]} != {D}"

        if B <= no_grid_cutoff:
            # Small/moderate batch: single invocation, no grid, everything
            # VMEM-resident.  Only a tiny round-to-8 sublane pad on B.
            Bp = _round_up(B, 8)
            x_p = jnp.pad(x2d, ((0, Bp - B), (0, 0))) if Bp != B else x2d
            out = pl.pallas_call(
                mlp_kernel,
                out_shape=jax.ShapeDtypeStruct((Bp, Cp), jnp.float32),
                in_specs=[pl.BlockSpec(memory_space=pltpu.MemorySpace.VMEM)] * 5,
                out_specs=pl.BlockSpec(memory_space=pltpu.MemorySpace.VMEM),
            )(x_p, w1_p, b1_p, w2_p, b2_p)
            return out[:B, :C]

        # Large batch: tile B with a "parallel" grid (>= 2 steps here, so both
        # v7x TensorCores get work).  No batch padding: cdiv grid + masked
        # partial last block (rows are independent; no cross-row reduction).
        # Weights/biases stay VMEM-resident (constant index_map, single buffer).
        n_steps = pl.cdiv(B, batch_tile)
        out = pl.pallas_call(
            mlp_kernel,
            out_shape=jax.ShapeDtypeStruct((B, Cp), jnp.float32),
            grid=(n_steps,),
            in_specs=[
                pl.BlockSpec((batch_tile, D), lambda i: (i, 0)),
                pl.BlockSpec((D, Hp), lambda i: (0, 0),
                             pipeline_mode=pl.Buffered(1)),
                pl.BlockSpec((1, Hp), lambda i: (0, 0),
                             pipeline_mode=pl.Buffered(1)),
                pl.BlockSpec((Hp, Cp), lambda i: (0, 0),
                             pipeline_mode=pl.Buffered(1)),
                pl.BlockSpec((1, Cp), lambda i: (0, 0),
                             pipeline_mode=pl.Buffered(1)),
            ],
            out_specs=pl.BlockSpec((batch_tile, Cp), lambda i: (i, 0)),
            compiler_params=pltpu.CompilerParams(
                dimension_semantics=("parallel",),
                # Headroom above v5e's 16 MiB scoped default; well under v7x's
                # 64 MiB physical VMEM even with f32 x blocks double-buffered.
                vmem_limit_bytes=32 * 1024 * 1024,
            ),
            # TODO(synk): if D grows large (real images), add a K grid axis over
            # D with an f32 VMEM accumulator + pl.when init/finalize, and
            # re-budget tiles against v7x's 64 MiB physical VMEM.
        )(x2d, w1_p, b1_p, w2_p, b2_p)
        return out[:B, :C]

    return forward


def init_params(key, input_size, hidden_size, num_classes):
    """Deterministic synthetic init (Kaiming-uniform-ish like nn.Linear)."""
    k1, k2, k3, k4 = jax.random.split(key, 4)
    bound1 = 1.0 / (input_size ** 0.5)
    bound2 = 1.0 / (hidden_size ** 0.5)
    # stored as (in_features, out_features) == PyTorch weight.T
    w1 = jax.random.uniform(k1, (input_size, hidden_size), jnp.float32,
                            -bound1, bound1)
    b1 = jax.random.uniform(k2, (1, hidden_size), jnp.float32, -bound1, bound1)
    w2 = jax.random.uniform(k3, (hidden_size, num_classes), jnp.float32,
                            -bound2, bound2)
    b2 = jax.random.uniform(k4, (1, num_classes), jnp.float32, -bound2, bound2)
    return w1, b1, w2, b2


def _reference_forward(x, w1, b1, w2, b2):
    """Pure-JAX reference with the same bf16-operand / f32-accumulate recipe."""
    x2d = x.reshape(x.shape[0], -1)
    h = jnp.dot(x2d.astype(jnp.bfloat16), w1.astype(jnp.bfloat16),
                preferred_element_type=jnp.float32) + b1.reshape(1, -1)
    h = jnp.maximum(h, 0.0)
    return jnp.dot(h.astype(jnp.bfloat16), w2.astype(jnp.bfloat16),
                   preferred_element_type=jnp.float32) + b2.reshape(1, -1)


if __name__ == "__main__":
    key = jax.random.PRNGKey(0)
    kx, kx2, kp = jax.random.split(key, 3)

    # Small shapes consistent with the module: input flattened to D = 4*16*16.
    B, C_in, Hs, Ws = 2, 4, 16, 16
    input_size = C_in * Hs * Ws            # 1024
    hidden_size = 32
    num_classes = 8

    w1, b1, w2, b2 = init_params(kp, input_size, hidden_size, num_classes)

    # Padded bf16 weights are prepared once here (hoisted out of per-call path).
    forward = make_mlp_forward(w1, b1, w2, b2)

    # --- Tiny-batch path (single call, no grid) ---
    x = jax.random.normal(kx, (B, C_in, Hs, Ws), jnp.float32)
    out = jax.block_until_ready(forward(x))
    ref = _reference_forward(x, w1, b1, w2, b2)
    assert out.shape == (B, num_classes)
    assert jnp.allclose(out, ref, atol=2e-3, rtol=2e-3), \
        f"tiny-batch mismatch: max abs err {jnp.max(jnp.abs(out - ref))}"

    # --- Grid path with a partial last block (cdiv grid, no batch padding) ---
    # Small tile / cutoff overrides purely to exercise the pipelined path on
    # small test data (production defaults: batch_tile=512, no_grid_cutoff=1024).
    forward_grid = make_mlp_forward(w1, b1, w2, b2,
                                    batch_tile=128, no_grid_cutoff=64)
    B_big = 300                              # -> grid of 3 steps, last one partial
    x_big = jax.random.normal(kx2, (B_big, C_in, Hs, Ws), jnp.float32)
    out_big = jax.block_until_ready(forward_grid(x_big))
    ref_big = _reference_forward(x_big, w1, b1, w2, b2)
    assert out_big.shape == (B_big, num_classes)
    assert jnp.allclose(out_big, ref_big, atol=2e-3, rtol=2e-3), \
        f"batched mismatch: max abs err {jnp.max(jnp.abs(out_big - ref_big))}"

    print("KERNEL_OK")
</pallas_src>

<mosaic_0001>
module attributes {stable_mosaic.version = 11 : i64} {
  func.func @mlp_kernel(%arg0: memref<8x1024xf32, #tpu.memory_space<vmem>>, %arg1: memref<1024x128xbf16, #tpu.memory_space<vmem>>, %arg2: memref<1x128xf32, #tpu.memory_space<vmem>>, %arg3: memref<128x128xbf16, #tpu.memory_space<vmem>>, %arg4: memref<1x128xf32, #tpu.memory_space<vmem>>, %arg5: memref<8x128xf32, #tpu.memory_space<vmem>>) attributes {dimension_semantics = [], scalar_prefetch = 0 : i64, scratch_operands = 0 : i64, tpu.core_type = #tpu.core_type<tc>} {
    %c0 = arith.constant 0 : index
    %c0_0 = arith.constant 0 : index
    %0 = vector.load %arg0[%c0, %c0_0] : memref<8x1024xf32, #tpu.memory_space<vmem>>, vector<8x1024xf32>
    %1 = arith.truncf %0 : vector<8x1024xf32> to vector<8x1024xbf16>
    %c0_1 = arith.constant 0 : index
    %c0_2 = arith.constant 0 : index
    %2 = vector.load %arg1[%c0_1, %c0_2] : memref<1024x128xbf16, #tpu.memory_space<vmem>>, vector<1024x128xbf16>
    %cst = arith.constant dense<0.000000e+00> : vector<8x128xf32>
    %3 = tpu.matmul %1, %2, %cst {dimension_numbers = #tpu.dot_dimension_numbers<[1], [0], [0], [1], [0, 0, 1, 1], [], []>} : vector<8x1024xbf16>, vector<1024x128xbf16>, vector<8x128xf32> -> vector<8x128xf32>
    %c0_3 = arith.constant 0 : index
    %c0_4 = arith.constant 0 : index
    %4 = vector.load %arg2[%c0_3, %c0_4] : memref<1x128xf32, #tpu.memory_space<vmem>>, vector<1x128xf32>
    %5 = vector.broadcast %4 : vector<1x128xf32> to vector<8x128xf32>
    %6 = arith.addf %3, %5 : vector<8x128xf32>
    %cst_5 = arith.constant 0.000000e+00 : f32
    %7 = vector.broadcast %cst_5 : f32 to vector<8x128xf32>
    %8 = arith.maximumf %6, %7 : vector<8x128xf32>
    %9 = arith.truncf %8 : vector<8x128xf32> to vector<8x128xbf16>
    %c0_6 = arith.constant 0 : index
    %c0_7 = arith.constant 0 : index
    %10 = vector.load %arg3[%c0_6, %c0_7] : memref<128x128xbf16, #tpu.memory_space<vmem>>, vector<128x128xbf16>
    %cst_8 = arith.constant dense<0.000000e+00> : vector<8x128xf32>
    %11 = tpu.matmul %9, %10, %cst_8 {dimension_numbers = #tpu.dot_dimension_numbers<[1], [0], [0], [1], [0, 0, 1, 1], [], []>} : vector<8x128xbf16>, vector<128x128xbf16>, vector<8x128xf32> -> vector<8x128xf32>
    %c0_9 = arith.constant 0 : index
    %c0_10 = arith.constant 0 : index
    %12 = vector.load %arg4[%c0_9, %c0_10] : memref<1x128xf32, #tpu.memory_space<vmem>>, vector<1x128xf32>
    %13 = vector.broadcast %12 : vector<1x128xf32> to vector<8x128xf32>
    %14 = arith.addf %11, %13 : vector<8x128xf32>
    %c0_11 = arith.constant 0 : index
    %c0_12 = arith.constant 0 : index
    %15 = vector.load %arg5[%c0_11, %c0_12] : memref<8x128xf32, #tpu.memory_space<vmem>>, vector<8x128xf32>
    tpu.vector_store %arg5[%c0_11, %c0_12], %14 {strides = array<i32>} : memref<8x128xf32, #tpu.memory_space<vmem>>, vector<8x128xf32>,
    return
  }
}

</mosaic_0001>

<llo_original>
// kernel: forward.1
$region0: #{forward.1}
  #allocation0 [shape = 'u32[]', space=smem, size = 0x4, offset = 0x4, fixed_abs, tag = 'smem constant byte address 0x4 - core index']
  #allocation1 [shape = 'u32[72,128]{1,0:T(1,128)}', space=vmem, size = 0x9000, scoped, tag = 'internal scratch']
  %s0 = inlined_call_operand.vmem [shape: f32[8,1024], index: 0, kind: input, shape index: {}]
  %s1 = inlined_call_operand.hbm [shape: bf16[1024,128], index: 1, kind: input, shape index: {}]
  %s2 = inlined_call_operand.vmem [shape: f32[1,128], index: 2, kind: input, shape index: {}]
  %s3 = inlined_call_operand.vmem [shape: bf16[128,128], index: 3, kind: input, shape index: {}]
  %s4 = inlined_call_operand.vmem [shape: f32[1,128], index: 4, kind: input, shape index: {}]
  %s5 = inlined_call_operand.vmem [shape: f32[8,128], index: 5, kind: output, shape index: {}]
  %s6 = sld [smem:[#allocation0]]
  $region34: #{forward.1} parent=0
    _
  %s8 = ssub.s32 1, %s6
  %s9 = scalar_select 0, %s8, %s6
  $region1: #{forward.1} parent=0
    #allocation2 [shape = 'u8[262144]{0}', space=vmem, size = 0x40000, scoped, tag = 'input window, operand 1, single buffered']
    #allocation3 [shape = 's32[1]{0}', space=sflag, size = 0x4, scoped, tag = 'scoped memory for forward.1']
    %10 = vsyncpa [#allocation3], 0
    // Predicated region
    $region2: #{forward.1} parent=1 // pred_check
      _
    $region3: #{forward.1} parent=1 // pred_check_branch
      %12 = sbr.rel (0) target = $region5
    $region4: #{forward.1} parent=1 // pred_region
      _
    $region5: #{forward.1} parent=1 // pred_fallthru
      _
    // Predicated region
    $region6: #{forward.1} parent=1 // pred_check
      _
    $region7: #{forward.1} parent=1 // pred_check_branch
      %14 = sbr.rel (0) target = $region9
    $region8: #{forward.1} parent=1 // pred_region
      %16 = vsyncadd [#allocation3], 0
      %s17 = sshll.u32 %s1, 4
      %s18 = int_to_ptr.hbm [resolvable:$true] %s17
      %s19 = sshll.u32 [#allocation2], 4
      %s20 = int_to_ptr.vmem [resolvable:$true] %s19
      %25 = dma.hbm_to_vmem [thread:$0]  %s18, 8192, %s20, [#allocation3], 64, 64, 4
    $region9: #{forward.1} parent=1 // pred_fallthru
      _
    // Predicated region
    $region10: #{forward.1} parent=1 // pred_check
      _
    $region11: #{forward.1} parent=1 // pred_check_branch
      %27 = sbr.rel (0) target = $region13
    $region12: #{forward.1} parent=1 // pred_region
      _
    $region13: #{forward.1} parent=1 // pred_fallthru
      _
    // Predicated region
    $region14: #{forward.1} parent=1 // pred_check
      _
    $region15: #{forward.1} parent=1 // pred_check_branch
      %29 = sbr.rel (0) target = $region17
    $region16: #{forward.1} parent=1 // pred_region
      _
    $region17: #{forward.1} parent=1 // pred_fallthru
      _
    // Predicated region
    $region18: #{forward.1} parent=1 // pred_check
      _
    $region19: #{forward.1} parent=1 // pred_check_branch
      %31 = sbr.rel (0) target = $region21
    $region20: #{forward.1} parent=1 // pred_region
      _
    $region21: #{forward.1} parent=1 // pred_fallthru
      _
    // Predicated region
    $region22: #{forward.1} parent=1 // pred_check
      _
    $region23: #{forward.1} parent=1 // pred_check_branch
      %33 = sbr.rel (0) target = $region25
    $region24: #{forward.1} parent=1 // pred_region
      %35 = dma.done [#allocation3], 8192
    $region25: #{forward.1} parent=1 // pred_fallthru
      _
    %v36 = vld [vmem:[%s0] sm:$0xff]
    %v37 = vld [vmem:[%s0 + $0x8] sm:$0xff]
    %v38 = vld [vmem:[%s0 + $0x10] sm:$0xff]
    %v39 = vld [vmem:[%s0 + $0x18] sm:$0xff]
    %v40 = vld [vmem:[%s0 + $0x20] sm:$0xff]
    %v41 = vld [vmem:[%s0 + $0x28] sm:$0xff]
    %v42 = vld [vmem:[%s0 + $0x30] sm:$0xff]
    %v43 = vld [vmem:[%s0 + $0x38] sm:$0xff]
    %v44 = vpack.c.bf16 %v36, %v36
    %v45 = vpack.c.bf16 %v37, %v37
    %v46 = vpack.c.bf16 %v38, %v38
    %v47 = vpack.c.bf16 %v39, %v39
    %v48 = vpack.c.bf16 %v40, %v40
    %v49 = vpack.c.bf16 %v41, %v41
    %v50 = vpack.c.bf16 %v42, %v42
    %v51 = vpack.c.bf16 %v43, %v43
    %v52 = vld [vmem:[#allocation2] sm:$0xf]
    %v53 = vld [vmem:[#allocation2 + $0x4] sm:$0xf]
    %v54 = vld [vmem:[#allocation2 + $0x8] sm:$0xf]
    %v55 = vld [vmem:[#allocation2 + $0xc] sm:$0xf]
    %v56 = vld [vmem:[#allocation2 + $0x10] sm:$0xf]
    %v57 = vld [vmem:[#allocation2 + $0x14] sm:$0xf]
    %v58 = vld [vmem:[#allocation2 + $0x18] sm:$0xf]
    %v59 = vld [vmem:[#allocation2 + $0x1c] sm:$0xf]
    %v60 = vld [vmem:[#allocation2 + $0x20] sm:$0xf]
    %v61 = vld [vmem:[#allocation2 + $0x24] sm:$0xf]
    %v62 = vld [vmem:[#allocation2 + $0x28] sm:$0xf]
    %v63 = vld [vmem:[#allocation2 + $0x2c] sm:$0xf]
    %v64 = vld [vmem:[#allocation2 + $0x30] sm:$0xf]
    %v65 = vld [vmem:[#allocation2 + $0x34] sm:$0xf]
    %v66 = vld [vmem:[#allocation2 + $0x38] sm:$0xf]
    %v67 = vld [vmem:[#allocation2 + $0x3c] sm:$0xf]
    %v68 = vld [vmem:[#allocation2 + $0x40] sm:$0xf]
    %v69 = vld [vmem:[#allocation2 + $0x44] sm:$0xf]
    %v70 = vld [vmem:[#allocation2 + $0x48] sm:$0xf]
    %v71 = vld [vmem:[#allocation2 + $0x4c] sm:$0xf]
    %v72 = vld [vmem:[#allocation2 + $0x50] sm:$0xf]
    %v73 = vld [vmem:[#allocation2 + $0x54] sm:$0xf]
    %v74 = vld [vmem:[#allocation2 + $0x58] sm:$0xf]
    %v75 = vld [vmem:[#allocation2 + $0x5c] sm:$0xf]
    %v76 = vld [vmem:[#allocation2 + $0x60] sm:$0xf]
    %v77 = vld [vmem:[#allocation2 + $0x64] sm:$0xf]
    %v78 = vld [vmem:[#allocation2 + $0x68] sm:$0xf]
    %v79 = vld [vmem:[#allocation2 + $0x6c] sm:$0xf]
    %v80 = vld [vmem:[#allocation2 + $0x70] sm:$0xf]
    %v81 = vld [vmem:[#allocation2 + $0x74] sm:$0xf]
    %v82 = vld [vmem:[#allocation2 + $0x78] sm:$0xf]
    %v83 = vld [vmem:[#allocation2 + $0x7c] sm:$0xf]
    %v84 = vld [vmem:[#allocation2 + $0x80] sm:$0xf]
    %v85 = vld [vmem:[#allocation2 + $0x84] sm:$0xf]
    %v86 = vld [vmem:[#allocation2 + $0x88] sm:$0xf]
    %v87 = vld [vmem:[#allocation2 + $0x8c] sm:$0xf]
    %v88 = vld [vmem:[#allocation2 + $0x90] sm:$0xf]
    %v89 = vld [vmem:[#allocation2 + $0x94] sm:$0xf]
    %v90 = vld [vmem:[#allocation2 + $0x98] sm:$0xf]
    %v91 = vld [vmem:[#allocation2 + $0x9c] sm:$0xf]
    %v92 = vld [vmem:[#allocation2 + $0xa0] sm:$0xf]
    %v93 = vld [vmem:[#allocation2 + $0xa4] sm:$0xf]
    %v94 = vld [vmem:[#allocation2 + $0xa8] sm:$0xf]
    %v95 = vld [vmem:[#allocation2 + $0xac] sm:$0xf]
    %v96 = vld [vmem:[#allocation2 + $0xb0] sm:$0xf]
    %v97 = vld [vmem:[#allocation2 + $0xb4] sm:$0xf]
    %v98 = vld [vmem:[#allocation2 + $0xb8] sm:$0xf]
    %v99 = vld [vmem:[#allocation2 + $0xbc] sm:$0xf]
    %v100 = vld [vmem:[#allocation2 + $0xc0] sm:$0xf]
    %v101 = vld [vmem:[#allocation2 + $0xc4] sm:$0xf]
    %v102 = vld [vmem:[#allocation2 + $0xc8] sm:$0xf]
    %v103 = vld [vmem:[#allocation2 + $0xcc] sm:$0xf]
    %v104 = vld [vmem:[#allocation2 + $0xd0] sm:$0xf]
    %v105 = vld [vmem:[#allocation2 + $0xd4] sm:$0xf]
    %v106 = vld [vmem:[#allocation2 + $0xd8] sm:$0xf]
    %v107 = vld [vmem:[#allocation2 + $0xdc] sm:$0xf]
    %v108 = vld [vmem:[#allocation2 + $0xe0] sm:$0xf]
    %v109 = vld [vmem:[#allocation2 + $0xe4] sm:$0xf]
    %v110 = vld [vmem:[#allocation2 + $0xe8] sm:$0xf]
    %v111 = vld [vmem:[#allocation2 + $0xec] sm:$0xf]
    %v112 = vld [vmem:[#allocation2 + $0xf0] sm:$0xf]
    %v113 = vld [vmem:[#allocation2 + $0xf4] sm:$0xf]
    %v114 = vld [vmem:[#allocation2 + $0xf8] sm:$0xf]
    %v115 = vld [vmem:[#allocation2 + $0xfc] sm:$0xf]
    %v116 = vld [vmem:[#allocation2 + $0x100] sm:$0xf]
    %v117 = vld [vmem:[#allocation2 + $0x104] sm:$0xf]
    %v118 = vld [vmem:[#allocation2 + $0x108] sm:$0xf]
    %v119 = vld [vmem:[#allocation2 + $0x10c] sm:$0xf]
    %v120 = vld [vmem:[#allocation2 + $0x110] sm:$0xf]
    %v121 = vld [vmem:[#allocation2 + $0x114] sm:$0xf]
    %v122 = vld [vmem:[#allocation2 + $0x118] sm:$0xf]
    %v123 = vld [vmem:[#allocation2 + $0x11c] sm:$0xf]
    %v124 = vld [vmem:[#allocation2 + $0x120] sm:$0xf]
    %v125 = vld [vmem:[#allocation2 + $0x124] sm:$0xf]
    %v126 = vld [vmem:[#allocation2 + $0x128] sm:$0xf]
    %v127 = vld [vmem:[#allocation2 + $0x12c] sm:$0xf]
    %v128 = vld [vmem:[#allocation2 + $0x130] sm:$0xf]
    %v129 = vld [vmem:[#allocation2 + $0x134] sm:$0xf]
    %v130 = vld [vmem:[#allocation2 + $0x138] sm:$0xf]
    %v131 = vld [vmem:[#allocation2 + $0x13c] sm:$0xf]
    %v132 = vld [vmem:[#allocation2 + $0x140] sm:$0xf]
    %v133 = vld [vmem:[#allocation2 + $0x144] sm:$0xf]
    %v134 = vld [vmem:[#allocation2 + $0x148] sm:$0xf]
    %v135 = vld [vmem:[#allocation2 + $0x14c] sm:$0xf]
    %v136 = vld [vmem:[#allocation2 + $0x150] sm:$0xf]
    %v137 = vld [vmem:[#allocation2 + $0x154] sm:$0xf]
    %v138 = vld [vmem:[#allocation2 + $0x158] sm:$0xf]
    %v139 = vld [vmem:[#allocation2 + $0x15c] sm:$0xf]
    %v140 = vld [vmem:[#allocation2 + $0x160] sm:$0xf]
    %v141 = vld [vmem:[#allocation2 + $0x164] sm:$0xf]
    %v142 = vld [vmem:[#allocation2 + $0x168] sm:$0xf]
    %v143 = vld [vmem:[#allocation2 + $0x16c] sm:$0xf]
    %v144 = vld [vmem:[#allocation2 + $0x170] sm:$0xf]
    %v145 = vld [vmem:[#allocation2 + $0x174] sm:$0xf]
    %v146 = vld [vmem:[#allocation2 + $0x178] sm:$0xf]
    %v147 = vld [vmem:[#allocation2 + $0x17c] sm:$0xf]
    %v148 = vld [vmem:[#allocation2 + $0x180] sm:$0xf]
    %v149 = vld [vmem:[#allocation2 + $0x184] sm:$0xf]
    %v150 = vld [vmem:[#allocation2 + $0x188] sm:$0xf]
    %v151 = vld [vmem:[#allocation2 + $0x18c] sm:$0xf]
    %v152 = vld [vmem:[#allocation2 + $0x190] sm:$0xf]
    %v153 = vld [vmem:[#allocation2 + $0x194] sm:$0xf]
    %v154 = vld [vmem:[#allocation2 + $0x198] sm:$0xf]
    %v155 = vld [vmem:[#allocation2 + $0x19c] sm:$0xf]
    %v156 = vld [vmem:[#allocation2 + $0x1a0] sm:$0xf]
    %v157 = vld [vmem:[#allocation2 + $0x1a4] sm:$0xf]
    %v158 = vld [vmem:[#allocation2 + $0x1a8] sm:$0xf]
    %v159 = vld [vmem:[#allocation2 + $0x1ac] sm:$0xf]
    %v160 = vld [vmem:[#allocation2 + $0x1b0] sm:$0xf]
    %v161 = vld [vmem:[#allocation2 + $0x1b4] sm:$0xf]
    %v162 = vld [vmem:[#allocation2 + $0x1b8] sm:$0xf]
    %v163 = vld [vmem:[#allocation2 + $0x1bc] sm:$0xf]
    %v164 = vld [vmem:[#allocation2 + $0x1c0] sm:$0xf]
    %v165 = vld [vmem:[#allocation2 + $0x1c4] sm:$0xf]
    %v166 = vld [vmem:[#allocation2 + $0x1c8] sm:$0xf]
    %v167 = vld [vmem:[#allocation2 + $0x1cc] sm:$0xf]
    %v168 = vld [vmem:[#allocation2 + $0x1d0] sm:$0xf]
    %v169 = vld [vmem:[#allocation2 + $0x1d4] sm:$0xf]
    %v170 = vld [vmem:[#allocation2 + $0x1d8] sm:$0xf]
    %v171 = vld [vmem:[#allocation2 + $0x1dc] sm:$0xf]
    %v172 = vld [vmem:[#allocation2 + $0x1e0] sm:$0xf]
    %v173 = vld [vmem:[#allocation2 + $0x1e4] sm:$0xf]
    %v174 = vld [vmem:[#allocation2 + $0x1e8] sm:$0xf]
    %v175 = vld [vmem:[#allocation2 + $0x1ec] sm:$0xf]
    %v176 = vld [vmem:[#allocation2 + $0x1f0] sm:$0xf]
    %v177 = vld [vmem:[#allocation2 + $0x1f4] sm:$0xf]
    %v178 = vld [vmem:[#allocation2 + $0x1f8] sm:$0xf]
    %v179 = vld [vmem:[#allocation2 + $0x1fc] sm:$0xf]
    %v180 = vld [vmem:[%s2] sm:$0x1]
    %v182 = vperm.slane %v180, 0
    %v312 = vunpack.c.l.b16 %v52
    %v313 = vunpack.c.l.b16 %v53
    %v314 = vunpack.c.l.b16 %v54
    %v315 = vunpack.c.l.b16 %v55
    %v316 = vunpack.c.l.b16 %v56
    %v317 = vunpack.c.l.b16 %v57
    %v318 = vunpack.c.l.b16 %v58
    %v319 = vunpack.c.l.b16 %v59
    %v320 = vunpack.c.l.b16 %v60
    %v321 = vunpack.c.l.b16 %v61
    %v322 = vunpack.c.l.b16 %v62
    %v323 = vunpack.c.l.b16 %v63
    %v324 = vunpack.c.l.b16 %v64
    %v325 = vunpack.c.l.b16 %v65
    %v326 = vunpack.c.l.b16 %v66
    %v327 = vunpack.c.l.b16 %v67
    %v328 = vunpack.c.l.b16 %v68
    %v329 = vunpack.c.l.b16 %v69
    %v330 = vunpack.c.l.b16 %v70
    %v331 = vunpack.c.l.b16 %v71
    %v332 = vunpack.c.l.b16 %v72
    %v333 = vunpack.c.l.b16 %v73
    %v334 = vunpack.c.l.b16 %v74
    %v335 = vunpack.c.l.b16 %v75
    %v336 = vunpack.c.l.b16 %v76
    %v337 = vunpack.c.l.b16 %v77
    %v338 = vunpack.c.l.b16 %v78
    %v339 = vunpack.c.l.b16 %v79
    %v340 = vunpack.c.l.b16 %v80
    %v341 = vunpack.c.l.b16 %v81
    %v342 = vunpack.c.l.b16 %v82
    %v343 = vunpack.c.l.b16 %v83
    %v344 = vunpack.c.l.b16 %v84
    %v345 = vunpack.c.l.b16 %v85
    %v346 = vunpack.c.l.b16 %v86
    %v347 = vunpack.c.l.b16 %v87
    %v348 = vunpack.c.l.b16 %v88
    %v349 = vunpack.c.l.b16 %v89
    %v350 = vunpack.c.l.b16 %v90
    %v351 = vunpack.c.l.b16 %v91
    %v352 = vunpack.c.l.b16 %v92
    %v353 = vunpack.c.l.b16 %v93
    %v354 = vunpack.c.l.b16 %v94
    %v355 = vunpack.c.l.b16 %v95
    %v356 = vunpack.c.l.b16 %v96
    %v357 = vunpack.c.l.b16 %v97
    %v358 = vunpack.c.l.b16 %v98
    %v359 = vunpack.c.l.b16 %v99
    %v360 = vunpack.c.l.b16 %v100
    %v361 = vunpack.c.l.b16 %v101
    %v362 = vunpack.c.l.b16 %v102
    %v363 = vunpack.c.l.b16 %v103
    %v364 = vunpack.c.l.b16 %v104
    %v365 = vunpack.c.l.b16 %v105
    %v366 = vunpack.c.l.b16 %v106
    %v367 = vunpack.c.l.b16 %v107
    %v368 = vunpack.c.l.b16 %v108
    %v369 = vunpack.c.l.b16 %v109
    %v370 = vunpack.c.l.b16 %v110
    %v371 = vunpack.c.l.b16 %v111
    %v372 = vunpack.c.l.b16 %v112
    %v373 = vunpack.c.l.b16 %v113
    %v374 = vunpack.c.l.b16 %v114
    %v375 = vunpack.c.l.b16 %v115
    %v376 = vunpack.c.l.b16 %v116
    %v377 = vunpack.c.l.b16 %v117
    %v378 = vunpack.c.l.b16 %v118
    %v379 = vunpack.c.l.b16 %v119
    %v380 = vunpack.c.l.b16 %v120
    %v381 = vunpack.c.l.b16 %v121
    %v382 = vunpack.c.l.b16 %v122
    %v383 = vunpack.c.l.b16 %v123
    %v384 = vunpack.c.l.b16 %v124
    %v385 = vunpack.c.l.b16 %v125
    %v386 = vunpack.c.l.b16 %v126
    %v387 = vunpack.c.l.b16 %v127
    %v388 = vunpack.c.l.b16 %v128
    %v389 = vunpack.c.l.b16 %v129
    %v390 = vunpack.c.l.b16 %v130
    %v391 = vunpack.c.l.b16 %v131
    %v392 = vunpack.c.l.b16 %v132
    %v393 = vunpack.c.l.b16 %v133
    %v394 = vunpack.c.l.b16 %v134
    %v395 = vunpack.c.l.b16 %v135
    %v396 = vunpack.c.l.b16 %v136
    %v397 = vunpack.c.l.b16 %v137
    %v398 = vunpack.c.l.b16 %v138
    %v399 = vunpack.c.l.b16 %v139
    %v400 = vunpack.c.l.b16 %v140
    %v401 = vunpack.c.l.b16 %v141
    %v402 = vunpack.c.l.b16 %v142
    %v403 = vunpack.c.l.b16 %v143
    %v404 = vunpack.c.l.b16 %v144
    %v405 = vunpack.c.l.b16 %v145
    %v406 = vunpack.c.l.b16 %v146
    %v407 = vunpack.c.l.b16 %v147
    %v408 = vunpack.c.l.b16 %v148
    %v409 = vunpack.c.l.b16 %v149
    %v410 = vunpack.c.l.b16 %v150
    %v411 = vunpack.c.l.b16 %v151
    %v412 = vunpack.c.l.b16 %v152
    %v413 = vunpack.c.l.b16 %v153
    %v414 = vunpack.c.l.b16 %v154
    %v415 = vunpack.c.l.b16 %v155
    %v416 = vunpack.c.l.b16 %v156
    %v417 = vunpack.c.l.b16 %v157
    %v418 = vunpack.c.l.b16 %v158
    %v419 = vunpack.c.l.b16 %v159
    %v420 = vunpack.c.l.b16 %v160
    %v421 = vunpack.c.l.b16 %v161
    %v422 = vunpack.c.l.b16 %v162
    %v423 = vunpack.c.l.b16 %v163
    %v424 = vunpack.c.l.b16 %v164
    %v425 = vunpack.c.l.b16 %v165
    %v426 = vunpack.c.l.b16 %v166
    %v427 = vunpack.c.l.b16 %v167
    %v428 = vunpack.c.l.b16 %v168
    %v429 = vunpack.c.l.b16 %v169
    %v430 = vunpack.c.l.b16 %v170
    %v431 = vunpack.c.l.b16 %v171
    %v432 = vunpack.c.l.b16 %v172
    %v433 = vunpack.c.l.b16 %v173
    %v434 = vunpack.c.l.b16 %v174
    %v435 = vunpack.c.l.b16 %v175
    %v436 = vunpack.c.l.b16 %v176
    %v437 = vunpack.c.l.b16 %v177
    %v438 = vunpack.c.l.b16 %v178
    %v439 = vunpack.c.l.b16 %v179
    %v440 = vpack.c.b16 %v313, %v312
    %v441 = vpack.c.b16 %v315, %v314
    %v442 = vpack.c.b16 %v317, %v316
    %v443 = vpack.c.b16 %v319, %v318
    %v444 = vpack.c.b16 %v321, %v320
    %v445 = vpack.c.b16 %v323, %v322
    %v446 = vpack.c.b16 %v325, %v324
    %v447 = vpack.c.b16 %v327, %v326
    %v448 = vpack.c.b16 %v329, %v328
    %v449 = vpack.c.b16 %v331, %v330
    %v450 = vpack.c.b16 %v333, %v332
    %v451 = vpack.c.b16 %v335, %v334
    %v452 = vpack.c.b16 %v337, %v336
    %v453 = vpack.c.b16 %v339, %v338
    %v454 = vpack.c.b16 %v341, %v340
    %v455 = vpack.c.b16 %v343, %v342
    %v456 = vpack.c.b16 %v345, %v344
    %v457 = vpack.c.b16 %v347, %v346
    %v458 = vpack.c.b16 %v349, %v348
    %v459 = vpack.c.b16 %v351, %v350
    %v460 = vpack.c.b16 %v353, %v352
    %v461 = vpack.c.b16 %v355, %v354
    %v462 = vpack.c.b16 %v357, %v356
    %v463 = vpack.c.b16 %v359, %v358
    %v464 = vpack.c.b16 %v361, %v360
    %v465 = vpack.c.b16 %v363, %v362
    %v466 = vpack.c.b16 %v365, %v364
    %v467 = vpack.c.b16 %v367, %v366
    %v468 = vpack.c.b16 %v369, %v368
    %v469 = vpack.c.b16 %v371, %v370
    %v470 = vpack.c.b16 %v373, %v372
    %v471 = vpack.c.b16 %v375, %v374
    %v472 = vpack.c.b16 %v377, %v376
    %v473 = vpack.c.b16 %v379, %v378
    %v474 = vpack.c.b16 %v381, %v380
    %v475 = vpack.c.b16 %v383, %v382
    %v476 = vpack.c.b16 %v385, %v384
    %v477 = vpack.c.b16 %v387, %v386
    %v478 = vpack.c.b16 %v389, %v388
    %v479 = vpack.c.b16 %v391, %v390
    %v480 = vpack.c.b16 %v393, %v392
    %v481 = vpack.c.b16 %v395, %v394
    %v482 = vpack.c.b16 %v397, %v396
    %v483 = vpack.c.b16 %v399, %v398
    %v484 = vpack.c.b16 %v401, %v400
    %v485 = vpack.c.b16 %v403, %v402
    %v486 = vpack.c.b16 %v405, %v404
    %v487 = vpack.c.b16 %v407, %v406
    %v488 = vpack.c.b16 %v409, %v408
    %v489 = vpack.c.b16 %v411, %v410
    %v490 = vpack.c.b16 %v413, %v412
    %v491 = vpack.c.b16 %v415, %v414
    %v492 = vpack.c.b16 %v417, %v416
    %v493 = vpack.c.b16 %v419, %v418
    %v494 = vpack.c.b16 %v421, %v420
    %v495 = vpack.c.b16 %v423, %v422
    %v496 = vpack.c.b16 %v425, %v424
    %v497 = vpack.c.b16 %v427, %v426
    %v498 = vpack.c.b16 %v429, %v428
    %v499 = vpack.c.b16 %v431, %v430
    %v500 = vpack.c.b16 %v433, %v432
    %v501 = vpack.c.b16 %v435, %v434
    %v502 = vpack.c.b16 %v437, %v436
    %v503 = vpack.c.b16 %v439, %v438
    %568 = vmatpush.bf16.msra.mxu0 %v447
    %569 = vmatpush.bf16.msra.mxu0 %v446
    %570 = vmatpush.bf16.msra.mxu0 %v445
    %571 = vmatpush.bf16.msra.mxu0 %v444
    %572 = vmatpush.bf16.msra.mxu0 %v443
    %573 = vmatpush.bf16.msra.mxu0 %v442
    %574 = vmatpush.bf16.msra.mxu0 %v441
    %575 = vmatpush.bf16.msra.mxu0 %v440
    %576 = vmatmul.bf16.gmra.mxu0 %v44
    %v577 = vpop.f32.mrf.mxu0
    %v578 = vadd.f32 %v182, %v577
    %v579 = vpop.f32.mrf.mxu0
    %580 = vdwg.mxu0
    %581 = vmatpush.bf16.msra.mxu0 %v455
    %582 = vmatpush.bf16.msra.mxu0 %v454
    %583 = vmatpush.bf16.msra.mxu0 %v453
    %584 = vmatpush.bf16.msra.mxu0 %v452
    %585 = vmatpush.bf16.msra.mxu0 %v451
    %586 = vmatpush.bf16.msra.mxu0 %v450
    %587 = vmatpush.bf16.msra.mxu0 %v449
    %588 = vmatpush.bf16.msra.mxu0 %v448
    %589 = vmatmul.bf16.gmra.mxu0 %v45
    %v590 = vpop.f32.mrf.mxu0
    %v591 = vadd.f32 %v578, %v590
    %v592 = vpop.f32.mrf.mxu0
    %593 = vdwg.mxu0
    %594 = vmatpush.bf16.msra.mxu0 %v463
    %595 = vmatpush.bf16.msra.mxu0 %v462
    %596 = vmatpush.bf16.msra.mxu0 %v461
    %597 = vmatpush.bf16.msra.mxu0 %v460
    %598 = vmatpush.bf16.msra.mxu0 %v459
    %599 = vmatpush.bf16.msra.mxu0 %v458
    %600 = vmatpush.bf16.msra.mxu0 %v457
    %601 = vmatpush.bf16.msra.mxu0 %v456
    %602 = vmatmul.bf16.gmra.mxu0 %v46
    %v603 = vpop.f32.mrf.mxu0
    %v604 = vadd.f32 %v591, %v603
    %v605 = vpop.f32.mrf.mxu0
    %606 = vdwg.mxu0
    %607 = vmatpush.bf16.msra.mxu0 %v471
    %608 = vmatpush.bf16.msra.mxu0 %v470
    %609 = vmatpush.bf16.msra.mxu0 %v469
    %610 = vmatpush.bf16.msra.mxu0 %v468
    %611 = vmatpush.bf16.msra.mxu0 %v467
    %612 = vmatpush.bf16.msra.mxu0 %v466
    %613 = vmatpush.bf16.msra.mxu0 %v465
    %614 = vmatpush.bf16.msra.mxu0 %v464
    %615 = vmatmul.bf16.gmra.mxu0 %v47
    %v616 = vpop.f32.mrf.mxu0
    %v617 = vadd.f32 %v604, %v616
    %v618 = vpop.f32.mrf.mxu0
    %619 = vdwg.mxu0
    %620 = vmatpush.bf16.msra.mxu0 %v479
    %621 = vmatpush.bf16.msra.mxu0 %v478
    %622 = vmatpush.bf16.msra.mxu0 %v477
    %623 = vmatpush.bf16.msra.mxu0 %v476
    %624 = vmatpush.bf16.msra.mxu0 %v475
    %625 = vmatpush.bf16.msra.mxu0 %v474
    %626 = vmatpush.bf16.msra.mxu0 %v473
    %627 = vmatpush.bf16.msra.mxu0 %v472
    %628 = vmatmul.bf16.gmra.mxu0 %v48
    %v629 = vpop.f32.mrf.mxu0
    %v630 = vadd.f32 %v617, %v629
    %v631 = vpop.f32.mrf.mxu0
    %632 = vdwg.mxu0
    %633 = vmatpush.bf16.msra.mxu0 %v487
    %634 = vmatpush.bf16.msra.mxu0 %v486
    %635 = vmatpush.bf16.msra.mxu0 %v485
    %636 = vmatpush.bf16.msra.mxu0 %v484
    %637 = vmatpush.bf16.msra.mxu0 %v483
    %638 = vmatpush.bf16.msra.mxu0 %v482
    %639 = vmatpush.bf16.msra.mxu0 %v481
    %640 = vmatpush.bf16.msra.mxu0 %v480
    %641 = vmatmul.bf16.gmra.mxu0 %v49
    %v642 = vpop.f32.mrf.mxu0
    %v643 = vadd.f32 %v630, %v642
    %v644 = vpop.f32.mrf.mxu0
    %645 = vdwg.mxu0
    %646 = vmatpush.bf16.msra.mxu0 %v495
    %647 = vmatpush.bf16.msra.mxu0 %v494
    %648 = vmatpush.bf16.msra.mxu0 %v493
    %649 = vmatpush.bf16.msra.mxu0 %v492
    %650 = vmatpush.bf16.msra.mxu0 %v491
    %651 = vmatpush.bf16.msra.mxu0 %v490
    %652 = vmatpush.bf16.msra.mxu0 %v489
    %653 = vmatpush.bf16.msra.mxu0 %v488
    %654 = vmatmul.bf16.gmra.mxu0 %v50
    %v655 = vpop.f32.mrf.mxu0
    %v656 = vadd.f32 %v643, %v655
    %v657 = vpop.f32.mrf.mxu0
    %658 = vdwg.mxu0
    %659 = vmatpush.bf16.msra.mxu0 %v503
    %660 = vmatpush.bf16.msra.mxu0 %v502
    %661 = vmatpush.bf16.msra.mxu0 %v501
    %662 = vmatpush.bf16.msra.mxu0 %v500
    %663 = vmatpush.bf16.msra.mxu0 %v499
    %664 = vmatpush.bf16.msra.mxu0 %v498
    %665 = vmatpush.bf16.msra.mxu0 %v497
    %666 = vmatpush.bf16.msra.mxu0 %v496
    %667 = vmatmul.bf16.gmra.mxu0 %v51
    %v668 = vpop.f32.mrf.mxu0
    %v669 = vadd.f32 %v656, %v668
    %v670 = vpop.f32.mrf.mxu0
    %671 = vdwg.mxu0
    %v672 = vmax.f32 %v669, 0.0
    %v673 = vpack.c.bf16 %v672, %v672
    %v674 = vld [vmem:[%s3] sm:$0xf]
    %v675 = vld [vmem:[%s3 + $0x4] sm:$0xf]
    %v676 = vld [vmem:[%s3 + $0x8] sm:$0xf]
    %v677 = vld [vmem:[%s3 + $0xc] sm:$0xf]
    %v678 = vld [vmem:[%s3 + $0x10] sm:$0xf]
    %v679 = vld [vmem:[%s3 + $0x14] sm:$0xf]
    %v680 = vld [vmem:[%s3 + $0x18] sm:$0xf]
    %v681 = vld [vmem:[%s3 + $0x1c] sm:$0xf]
    %v682 = vld [vmem:[%s3 + $0x20] sm:$0xf]
    %v683 = vld [vmem:[%s3 + $0x24] sm:$0xf]
    %v684 = vld [vmem:[%s3 + $0x28] sm:$0xf]
    %v685 = vld [vmem:[%s3 + $0x2c] sm:$0xf]
    %v686 = vld [vmem:[%s3 + $0x30] sm:$0xf]
    %v687 = vld [vmem:[%s3 + $0x34] sm:$0xf]
    %v688 = vld [vmem:[%s3 + $0x38] sm:$0xf]
    %v689 = vld [vmem:[%s3 + $0x3c] sm:$0xf]
    %v690 = vld [vmem:[%s4] sm:$0x1]
    %v692 = vperm.slane %v690, 0
    %v710 = vunpack.c.l.b16 %v674
    %v711 = vunpack.c.l.b16 %v675
    %v712 = vunpack.c.l.b16 %v676
    %v713 = vunpack.c.l.b16 %v677
    %v714 = vunpack.c.l.b16 %v678
    %v715 = vunpack.c.l.b16 %v679
    %v716 = vunpack.c.l.b16 %v680
    %v717 = vunpack.c.l.b16 %v681
    %v718 = vunpack.c.l.b16 %v682
    %v719 = vunpack.c.l.b16 %v683
    %v720 = vunpack.c.l.b16 %v684
    %v721 = vunpack.c.l.b16 %v685
    %v722 = vunpack.c.l.b16 %v686
    %v723 = vunpack.c.l.b16 %v687
    %v724 = vunpack.c.l.b16 %v688
    %v725 = vunpack.c.l.b16 %v689
    %v726 = vpack.c.b16 %v711, %v710
    %v727 = vpack.c.b16 %v713, %v712
    %v728 = vpack.c.b16 %v715, %v714
    %v729 = vpack.c.b16 %v717, %v716
    %v730 = vpack.c.b16 %v719, %v718
    %v731 = vpack.c.b16 %v721, %v720
    %v732 = vpack.c.b16 %v723, %v722
    %v733 = vpack.c.b16 %v725, %v724
    %742 = vmatpush.bf16.msra.mxu0 %v733
    %743 = vmatpush.bf16.msra.mxu0 %v732
    %744 = vmatpush.bf16.msra.mxu0 %v731
    %745 = vmatpush.bf16.msra.mxu0 %v730
    %746 = vmatpush.bf16.msra.mxu0 %v729
    %747 = vmatpush.bf16.msra.mxu0 %v728
    %748 = vmatpush.bf16.msra.mxu0 %v727
    %749 = vmatpush.bf16.msra.mxu0 %v726
    %750 = vmatmul.bf16.gmra.mxu0 %v673
    %v751 = vpop.f32.mrf.mxu0
    %v752 = vadd.f32 %v692, %v751
    %v753 = vpop.f32.mrf.mxu0
    %754 = vdwg.mxu0
    %755 = vst [vmem:[%s5] sm:$0xff] %v752
    // Predicated region
    $region26: #{forward.1} parent=1 // pred_check
      _
    $region27: #{forward.1} parent=1 // pred_check_branch
      %757 = sbr.rel (0) target = $region29
    $region28: #{forward.1} parent=1 // pred_region
      _
    $region29: #{forward.1} parent=1 // pred_fallthru
      _
    // Predicated region
    $region30: #{forward.1} parent=1 // pred_check
      _
    $region31: #{forward.1} parent=1 // pred_check_branch
      %759 = sbr.rel (0) target = $region33
    $region32: #{forward.1} parent=1 // pred_region
      _
    $region33: #{forward.1} parent=1 // pred_fallthru
      _
    %760 = vsyncpa [#allocation3], 1

</llo_original>
